<compile_context>
chip_gen: v7x
topology: tpu7x:2x2x1
jax: 0.10.0
libtpu: 0.0.40
codegen_flags: <defaults>
</compile_context>

<pallas_src>
import jax
import jax.numpy as jnp
from jax.experimental import pallas as pl
from jax.experimental.pallas import tpu as pltpu


def _identity_kernel(x_ref, o_ref):
    # Pure copy: VMEM tile in -> VMEM tile out.
    o_ref[...] = x_ref[...]


def _round_up(n, m):
    return -(-n // m) * m


def _choose_lane(n, lane_cap):
    """Largest multiple of 128 that divides n (n % 128 == 0), capped at lane_cap."""
    lane = (min(lane_cap, n) // 128) * 128
    while lane > 128 and n % lane != 0:
        lane -= 128
    return lane


def _choose_tile_rows(rows, target_rows, sub):
    """Largest multiple of `sub` <= target_rows that divides `rows`, or None."""
    t = (target_rows // sub) * sub
    while t >= sub:
        if rows % t == 0:
            return t
        t -= sub
    return None


def identity_pallas(x, *, block_bytes=2 << 20, lane_cap=2048, donate_input=True):
    """Identity forward as a Pallas TPU copy kernel.

    The array is viewed (bitcast reshape) as a lane-dense [rows, lane] slab
    with lane a multiple of 128, tiled over rows in ~block_bytes blocks, and
    copied in place (output aliases the input buffer when donate_input=True).
    Padding / trailing slices are only emitted for non-128-aligned sizes.
    """
    orig_shape = x.shape
    dtype = x.dtype
    n = x.size
    if n == 0:
        return x

    itemsize = jnp.dtype(dtype).itemsize
    # Dtype-aware sublane multiple (f32 -> 8, bf16 -> 16, int8/fp8 -> 32).
    sub = {1: 32, 2: 16}.get(itemsize, 8)

    flat = x.reshape(-1)  # contiguous reshape: layout bitcast, no HBM traffic

    # ---- choose lane width; pad only when n is not 128-aligned ----
    if n % 128 == 0:
        lane = _choose_lane(n, lane_cap)
        pad = 0
    else:
        lane = 128
        pad = _round_up(n, lane) - n

    rows = (n + pad) // lane

    # ---- choose row tile targeting ~block_bytes per block ----
    target_rows = max(sub, (block_bytes // (lane * itemsize) // sub) * sub)
    if rows <= target_rows:
        tile_rows = rows  # full-extent block is always layout-legal
    else:
        tile_rows = _choose_tile_rows(rows, target_rows, sub)
        if tile_rows is None:
            # Rare ragged row count: pad minimally (< sub rows) so a legal
            # (multiple-of-sub) tile divides evenly.
            new_rows = _round_up(rows, sub)
            pad += (new_rows - rows) * lane
            rows = new_rows
            tile_rows = _choose_tile_rows(rows, target_rows, sub)

    if pad:
        flat = jnp.pad(flat, (0, pad))
    x2d = flat.reshape(rows, lane)  # bitcast, no HBM traffic

    grid = rows // tile_rows

    out2d = pl.pallas_call(
        _identity_kernel,
        out_shape=jax.ShapeDtypeStruct((rows, lane), dtype),
        grid=(grid,),
        in_specs=[pl.BlockSpec((tile_rows, lane), lambda i: (i, 0))],
        out_specs=pl.BlockSpec((tile_rows, lane), lambda i: (i, 0)),
        input_output_aliases={0: 0} if donate_input else {},
        compiler_params=pltpu.CompilerParams(
            dimension_semantics=("parallel",),
        ),
    )(x2d)

    out = out2d.reshape(-1)
    if pad:
        out = out[:n]
    return out.reshape(orig_shape)


if __name__ == "__main__":
    key = jax.random.PRNGKey(0)

    # Small deterministic input consistent with the module (rank-agnostic).
    x = jax.random.normal(key, (2, 4, 16, 16), dtype=jnp.float32)
    out = jax.block_until_ready(identity_pallas(x))
    assert out.shape == x.shape
    assert out.dtype == x.dtype
    assert jnp.array_equal(out, x), "identity kernel does not match input"

    # Non-128-aligned (ragged) path: wrapper pads then trims.
    x_odd = jax.random.normal(jax.random.PRNGKey(1), (3, 5, 7), dtype=jnp.float32)
    out_odd = jax.block_until_ready(identity_pallas(x_odd))
    assert jnp.array_equal(out_odd, x_odd), "identity kernel (padded path) mismatch"

    # Multi-block path (grid > 1) with a packed dtype (bf16), no padding.
    x_big = jax.random.normal(jax.random.PRNGKey(2), (8, 512, 512), dtype=jnp.bfloat16)
    out_big = jax.block_until_ready(identity_pallas(x_big))
    assert out_big.shape == x_big.shape
    assert out_big.dtype == x_big.dtype
    assert jnp.array_equal(out_big, x_big), "identity kernel (multi-block path) mismatch"

    print("KERNEL_OK")
</pallas_src>

<mosaic_0001>
module attributes {stable_mosaic.version = 11 : i64} {
  func.func @_identity_kernel(%arg0: i32, %arg1: memref<1x2048xf32, #tpu.memory_space<vmem>>, %arg2: memref<1x2048xf32, #tpu.memory_space<vmem>>) attributes {dimension_semantics = [#tpu.dimension_semantics<parallel>], iteration_bounds = array<i64: 1>, scalar_prefetch = 0 : i64, scratch_operands = 0 : i64, tpu.core_type = #tpu.core_type<tc>, window_params = [{transform_indices = @transform_0, window_bounds = array<i64: 1, 2048>}, {transform_indices = @transform_1, window_bounds = array<i64: 1, 2048>}]} {
    %c0 = arith.constant 0 : index
    %c0_0 = arith.constant 0 : index
    %0 = vector.load %arg1[%c0, %c0_0] : memref<1x2048xf32, #tpu.memory_space<vmem>>, vector<1x2048xf32>
    %c0_1 = arith.constant 0 : index
    %c0_2 = arith.constant 0 : index
    %1 = vector.load %arg2[%c0_1, %c0_2] : memref<1x2048xf32, #tpu.memory_space<vmem>>, vector<1x2048xf32>
    tpu.vector_store %arg2[%c0_1, %c0_2], %0 {strides = array<i32>} : memref<1x2048xf32, #tpu.memory_space<vmem>>, vector<1x2048xf32>,
    return
  }
  func.func @transform_0(%arg0: i32) -> (i32, i32) {
    %c0_i32 = arith.constant 0 : i32
    %c0_i32_0 = arith.constant 0 : i32
    return %arg0, %c0_i32 : i32, i32
  }
  func.func @transform_1(%arg0: i32) -> (i32, i32) {
    %c0_i32 = arith.constant 0 : i32
    %c0_i32_0 = arith.constant 0 : i32
    return %arg0, %c0_i32 : i32, i32
  }
}

</mosaic_0001>

<llo_original>
// kernel: tpu_custom_call.1
$region0: #{tpu_custom_call.1}
  #allocation0 [shape = 'u32[]', space=smem, size = 0x4, offset = 0x4, fixed_abs, tag = 'smem constant byte address 0x4 - core index']
  #allocation1 [shape = 'u32[144,128]{1,0:T(1,128)}', space=vmem, size = 0x12000, scoped, tag = 'internal scratch']
  %s0 = inlined_call_operand.hbm [shape: f32[1,2048], index: 0, kind: input, shape index: {}, may-alias: {0,1}]
  %s1 = inlined_call_operand.hbm [shape: f32[1,2048], index: 1, kind: output, shape index: {}, may-alias: {0,1}]
  %s2 = sld [smem:[#allocation0]]
  $region18: #{tpu_custom_call.1} parent=0
    _
  %s4 = ssub.s32 1, %s2
  %s5 = scalar_select 0, %s4, %s2
  $region1: #{tpu_custom_call.1} parent=0
    #allocation2 [shape = 'u8[8192]{0}', space=vmem, size = 0x2000, scoped, tag = 'input window, operand 0, single buffered']
    #allocation3 [shape = 's32[1]{0}', space=sflag, size = 0x4, scoped, tag = 'scoped memory for tpu_custom_call.1']
    #allocation4 [shape = 's32[1]{0}', space=sflag, size = 0x4, scoped, tag = 'scoped memory for tpu_custom_call.1']
    #allocation5 [shape = 'u8[8192]{0}', space=vmem, size = 0x2000, scoped, tag = 'output window, operand 0, single buffered']
    %6 = vsyncpa [#allocation3], 0
    %7 = vsyncpa [#allocation4], 0
    // Predicated region
    $region2: #{tpu_custom_call.1} parent=1 // pred_check
      _
    $region3: #{tpu_custom_call.1} parent=1 // pred_check_branch
      %9 = sbr.rel (0) target = $region5
    $region4: #{tpu_custom_call.1} parent=1 // pred_region
      %s11 = ssub.s32 256, 256
      %12 = vsyncadd [#allocation3], %s11
      %s14 = sshll.u32 [#allocation2], 4
      %s15 = int_to_ptr.vmem [resolvable:$true] %s14
      %17 = dma.hbm_to_vmem [thread:$0]  %s0, 256, %s15, [#allocation3]
    $region5: #{tpu_custom_call.1} parent=1 // pred_fallthru
      _
    // Predicated region
    $region6: #{tpu_custom_call.1} parent=1 // pred_check
      _
    $region7: #{tpu_custom_call.1} parent=1 // pred_check_branch
      %19 = sbr.rel (0) target = $region9
    $region8: #{tpu_custom_call.1} parent=1 // pred_region
      %20 = dma.done [#allocation3], 256
    $region9: #{tpu_custom_call.1} parent=1 // pred_fallthru
      _
    %v21 = vld [vmem:[#allocation2] sm:$0xff]
    %v22 = vld [vmem:[#allocation2 + $0x8] sm:$0xff]
    %23 = vst [vmem:[#allocation5] sm:$0xff] %v21
    %24 = vst [vmem:[#allocation5 + $0x8] sm:$0xff] %v22
    // Predicated region
    $region10: #{tpu_custom_call.1} parent=1 // pred_check
      _
    $region11: #{tpu_custom_call.1} parent=1 // pred_check_branch
      %26 = sbr.rel (0) target = $region13
    $region12: #{tpu_custom_call.1} parent=1 // pred_region
      %s28 = ssub.s32 256, 256
      %29 = vsyncadd [#allocation4], %s28
      %s31 = sshll.u32 [#allocation5], 4
      %s32 = int_to_ptr.vmem [resolvable:$true] %s31
      %34 = dma.vmem_to_hbm [thread:$0]  %s32, 256, %s1, [#allocation4]
    $region13: #{tpu_custom_call.1} parent=1 // pred_fallthru
      _
    // Predicated region
    $region14: #{tpu_custom_call.1} parent=1 // pred_check
      _
    $region15: #{tpu_custom_call.1} parent=1 // pred_check_branch
      %36 = sbr.rel (0) target = $region17
    $region16: #{tpu_custom_call.1} parent=1 // pred_region
      %37 = dma.done [#allocation4], 256
    $region17: #{tpu_custom_call.1} parent=1 // pred_fallthru
      _
    %38 = vsyncpa [#allocation3], 1
    %39 = vsyncpa [#allocation4], 1

</llo_original>
